<compile_context>
chip_gen: v6e
topology: v6e:2x2x1
jax: 0.10.0
libtpu: 0.0.40
codegen_flags: <defaults>
</compile_context>

<pallas_src>
import functools

import jax
import jax.numpy as jnp
import numpy as np
from jax.experimental import pallas as pl
from jax.experimental.pallas import tpu as pltpu

LANE = 128
BATCH_ALIGN = 16      # bf16 output tiles pack 16 rows per sublane group


def _round_up(x, m):
    return (x + m - 1) // m * m


# ----------------------------------------------------------------------------
# Pallas kernel: one batch tile -> obs-norm + 3 fused bf16 matmuls (+tanh).
# ----------------------------------------------------------------------------
def actor_critic_kernel(x_ref, norm_ref, w1_ref, w2_ref, w3_ref, b_ref,
                        out_ref, *, obs_clip):
    x = x_ref[...]                                   # (TB, S) f32
    norm = norm_ref[...]                             # (2, S): [scale; shift]
    scale = norm[0:1, :]
    shift = norm[1:2, :]
    # Pre-folded obs-norm: clip(x * inv_std - mean * inv_std).
    xn = jnp.clip(x * scale + shift, -obs_clip, obs_clip)

    b = b_ref[...]                                   # (3, P) f32 fused biases

    # Layer 1: actor|critic concatenated along the output (lane) axis.
    h = jnp.dot(xn.astype(jnp.bfloat16), w1_ref[...],
                preferred_element_type=jnp.float32) + b[0:1, :]
    h = jnp.tanh(h)
    # Layer 2: block-diagonal [aw2 0; 0 cw2] keeps the branches separate.
    h = jnp.dot(h.astype(jnp.bfloat16), w2_ref[...],
                preferred_element_type=jnp.float32) + b[1:2, :]
    h = jnp.tanh(h)
    # Layer 3: block-diagonal into [logits | value | zero-pad].
    y = jnp.dot(h.astype(jnp.bfloat16), w3_ref[...],
                preferred_element_type=jnp.float32) + b[2:3, :]
    out_ref[...] = y.astype(out_ref.dtype)           # lane-dense bf16 store


# ----------------------------------------------------------------------------
# Host-side packing (once per parameter update, not per forward call):
#   - fuse actor/critic weights (bf16), pad to lane-dense 128-wide blocks,
#   - pre-fold obs-norm into (scale, shift).
# NOTE: the block-diagonal fusion of layers 2/3 is FLOP-neutral only while
# 2*hidden_dim <= 128; for bigger hidden sizes switch layers 2/3 to two
# H-wide dots instead of padding to (P, P).
# ----------------------------------------------------------------------------
def pack_params(p, *, eps=1e-8):
    S, H = p["aw1"].shape
    A = p["aw3"].shape[1]
    P = max(_round_up(2 * H, LANE), _round_up(A + 1, LANE))
    f32 = jnp.float32

    w1 = jnp.zeros((S, P), f32)
    w1 = w1.at[:, :H].set(p["aw1"]).at[:, H:2 * H].set(p["cw1"])

    w2 = jnp.zeros((P, P), f32)
    w2 = w2.at[:H, :H].set(p["aw2"]).at[H:2 * H, H:2 * H].set(p["cw2"])

    w3 = jnp.zeros((P, P), f32)
    w3 = w3.at[:H, :A].set(p["aw3"]).at[H:2 * H, A:A + 1].set(p["cw3"])

    biases = jnp.zeros((3, P), f32)
    biases = biases.at[0, :H].set(p["ab1"][0]).at[0, H:2 * H].set(p["cb1"][0])
    biases = biases.at[1, :H].set(p["ab2"][0]).at[1, H:2 * H].set(p["cb2"][0])
    biases = biases.at[2, :A].set(p["ab3"][0]).at[2, A].set(p["cb3"][0, 0])

    # Matches the module: (x - mean) / (sqrt(var) + eps), folded to scale/shift.
    inv_std = 1.0 / (jnp.sqrt(p["obs_var"]) + eps)
    scale = inv_std
    shift = -p["obs_mean"] * inv_std
    norm = jnp.concatenate([scale, shift], axis=0)   # (2, S)

    packed = dict(norm=norm,
                  w1=w1.astype(jnp.bfloat16),
                  w2=w2.astype(jnp.bfloat16),
                  w3=w3.astype(jnp.bfloat16),
                  biases=biases)
    return packed, A


def _choose_batch_tile(B, max_tile):
    b_aligned = _round_up(B, BATCH_ALIGN)
    tb = min(max_tile, b_aligned)
    # Prefer >= 2 grid steps when the batch allows it so ("parallel",) can
    # shard across v7x's two TensorCores (no-op on v5e/v6e).
    if tb == b_aligned and b_aligned >= 2 * BATCH_ALIGN:
        tb = _round_up((b_aligned + 1) // 2, BATCH_ALIGN)
    return tb


# ----------------------------------------------------------------------------
# Wrapper: grid over the batch axis, weights resident, outputs sliced back.
# Jitted so the slab slices fuse into consumers instead of re-reading HBM.
# ----------------------------------------------------------------------------
@functools.partial(jax.jit,
                   static_argnames=("action_dim", "obs_clip", "max_batch_tile"))
def actor_critic_forward(state, packed, *, action_dim, obs_clip=5.0,
                         max_batch_tile=2048):
    """state: (B, state_dim) f32. Returns (actor_output (B, A), value (B, 1))."""
    B, S = state.shape
    P = packed["w1"].shape[1]

    TB = _choose_batch_tile(B, max_batch_tile)
    B_pad = _round_up(B, TB)
    if B_pad != B:
        state = jnp.pad(state, ((0, B_pad - B), (0, 0)))

    kernel = functools.partial(actor_critic_kernel, obs_clip=float(obs_clip))

    def resident(shape):
        # Same block index every grid step -> fetched once, stays in VMEM.
        return pl.BlockSpec(shape, lambda i: (0, 0))

    out_full = pl.pallas_call(
        kernel,
        out_shape=jax.ShapeDtypeStruct((B_pad, P), jnp.bfloat16),
        grid=(B_pad // TB,),
        in_specs=[
            pl.BlockSpec((TB, S), lambda i: (i, 0)),   # state tile (pipelined)
            resident((2, S)),                          # [scale; shift]
            resident((S, P)),                          # fused W1 (bf16)
            resident((P, P)),                          # block-diagonal W2
            resident((P, P)),                          # block-diagonal W3
            resident((3, P)),                          # fused biases (f32)
        ],
        out_specs=pl.BlockSpec((TB, P), lambda i: (i, 0)),
        compiler_params=pltpu.CompilerParams(
            dimension_semantics=("parallel",)),
    )(state, packed["norm"], packed["w1"], packed["w2"], packed["w3"],
      packed["biases"])

    A = action_dim
    actor_out = out_full[:B, :A].astype(jnp.float32)
    value = out_full[:B, A:A + 1].astype(jnp.float32)
    return actor_out, value


# ----------------------------------------------------------------------------
# Deterministic parameter construction (mirrors ActorCritic.__init__ shapes).
# Weights are stored transposed vs. PyTorch, i.e. (in_features, out_features).
# ----------------------------------------------------------------------------
def _linear_params(key, fan_in, fan_out):
    """PyTorch nn.Linear default init: U(-1/sqrt(fan_in), 1/sqrt(fan_in))."""
    kw, kb = jax.random.split(key)
    bound = 1.0 / np.sqrt(fan_in)
    w = jax.random.uniform(kw, (fan_in, fan_out), jnp.float32, -bound, bound)
    b = jax.random.uniform(kb, (1, fan_out), jnp.float32, -bound, bound)
    return w, b


def _normc_linear(key, fan_in, fan_out, gain):
    """normc init on the (out, in) torch weight, norm over dim=0; bias = 0."""
    w_torch = jax.random.normal(key, (fan_out, fan_in), jnp.float32)
    norm = jnp.linalg.norm(w_torch, axis=0, keepdims=True)   # (1, fan_in)
    w_torch = w_torch * (gain / norm)
    return w_torch.T, jnp.zeros((1, fan_out), jnp.float32)   # stored (in, out)


def make_params(key, state_dim, action_dim, hidden_dim):
    keys = jax.random.split(key, 8)
    aw1, ab1 = _linear_params(keys[0], state_dim, hidden_dim)
    aw2, ab2 = _linear_params(keys[1], hidden_dim, hidden_dim)
    aw3, ab3 = _normc_linear(keys[2], hidden_dim, action_dim, gain=0.01)
    cw1, cb1 = _linear_params(keys[3], state_dim, hidden_dim)
    cw2, cb2 = _linear_params(keys[4], hidden_dim, hidden_dim)
    cw3, cb3 = _normc_linear(keys[5], hidden_dim, 1, gain=1.0)
    # RunningMeanStd buffers: mean=0, var=1 (fresh module), kept 2-D for TPU.
    obs_mean = jnp.zeros((1, state_dim), jnp.float32)
    obs_var = jnp.ones((1, state_dim), jnp.float32)
    return dict(
        aw1=aw1, ab1=ab1, aw2=aw2, ab2=ab2, aw3=aw3, ab3=ab3,
        cw1=cw1, cb1=cb1, cw2=cw2, cb2=cb2, cw3=cw3, cb3=cb3,
        obs_mean=obs_mean, obs_var=obs_var,
    )


# ----------------------------------------------------------------------------
# Pure-JAX f32 reference (unfused) for a correctness check.
# ----------------------------------------------------------------------------
def reference_forward(state, p, obs_clip=5.0):
    xn = (state - p["obs_mean"]) / (jnp.sqrt(p["obs_var"]) + 1e-8)
    xn = jnp.clip(xn, -obs_clip, obs_clip)
    h = jnp.tanh(xn @ p["aw1"] + p["ab1"])
    h = jnp.tanh(h @ p["aw2"] + p["ab2"])
    actor = h @ p["aw3"] + p["ab3"]
    g = jnp.tanh(xn @ p["cw1"] + p["cb1"])
    g = jnp.tanh(g @ p["cw2"] + p["cb2"])
    value = g @ p["cw3"] + p["cb3"]
    return actor, value


if __name__ == "__main__":
    B, STATE_DIM, ACTION_DIM, HIDDEN_DIM = 8, 16, 4, 32

    key = jax.random.PRNGKey(0)
    k_state, k_params = jax.random.split(key)
    state = jax.random.normal(k_state, (B, STATE_DIM), jnp.float32) * 2.0
    params = make_params(k_params, STATE_DIM, ACTION_DIM, HIDDEN_DIM)
    packed, action_dim = pack_params(params)

    actor_out, value = actor_critic_forward(state, packed,
                                            action_dim=action_dim)
    actor_out, value = jax.block_until_ready((actor_out, value))

    ref_actor, ref_value = reference_forward(state, params)
    assert actor_out.shape == (B, ACTION_DIM) and value.shape == (B, 1)
    # bf16 weights/activations/output vs. an f32 reference -> loose tolerances.
    np.testing.assert_allclose(np.asarray(actor_out), np.asarray(ref_actor),
                               rtol=5e-2, atol=8e-2)
    np.testing.assert_allclose(np.asarray(value), np.asarray(ref_value),
                               rtol=5e-2, atol=8e-2)

    # TODO(synk): RunningMeanStd.update and distribution sampling (act /
    # evaluate_actions) are stateful / stochastic host-side logic outside the
    # forward pass and are intentionally not in the kernel.
    print("KERNEL_OK")
</pallas_src>

<mosaic_0001>
module attributes {stable_mosaic.version = 11 : i64} {
  func.func @actor_critic_kernel(%arg0: i32, %arg1: memref<16x16xf32, #tpu.memory_space<vmem>>, %arg2: memref<2x16xf32, #tpu.memory_space<vmem>>, %arg3: memref<16x128xbf16, #tpu.memory_space<vmem>>, %arg4: memref<128x128xbf16, #tpu.memory_space<vmem>>, %arg5: memref<128x128xbf16, #tpu.memory_space<vmem>>, %arg6: memref<3x128xf32, #tpu.memory_space<vmem>>, %arg7: memref<16x128xbf16, #tpu.memory_space<vmem>>) attributes {dimension_semantics = [#tpu.dimension_semantics<parallel>], iteration_bounds = array<i64: 1>, scalar_prefetch = 0 : i64, scratch_operands = 0 : i64, tpu.core_type = #tpu.core_type<tc>, window_params = [{transform_indices = @transform_0, window_bounds = array<i64: 16, 16>}, {pipeline_mode = #tpu.pipeline_mode<synchronous>, transform_indices = @transform_1, window_bounds = array<i64: 2, 16>}, {pipeline_mode = #tpu.pipeline_mode<synchronous>, transform_indices = @transform_2, window_bounds = array<i64: 16, 128>}, {pipeline_mode = #tpu.pipeline_mode<synchronous>, transform_indices = @transform_3, window_bounds = array<i64: 128, 128>}, {pipeline_mode = #tpu.pipeline_mode<synchronous>, transform_indices = @transform_4, window_bounds = array<i64: 128, 128>}, {pipeline_mode = #tpu.pipeline_mode<synchronous>, transform_indices = @transform_5, window_bounds = array<i64: 3, 128>}, {transform_indices = @transform_6, window_bounds = array<i64: 16, 128>}]} {
    %c0 = arith.constant 0 : index
    %c0_0 = arith.constant 0 : index
    %0 = vector.load %arg1[%c0, %c0_0] : memref<16x16xf32, #tpu.memory_space<vmem>>, vector<16x16xf32>
    %c0_1 = arith.constant 0 : index
    %c0_2 = arith.constant 0 : index
    %1 = vector.load %arg2[%c0_1, %c0_2] : memref<2x16xf32, #tpu.memory_space<vmem>>, vector<2x16xf32>
    %2 = vector.extract_strided_slice %1 {offsets = [0, 0], sizes = [1, 16], strides = [1, 1]} : vector<2x16xf32> to vector<1x16xf32>
    %3 = vector.extract_strided_slice %1 {offsets = [1, 0], sizes = [1, 16], strides = [1, 1]} : vector<2x16xf32> to vector<1x16xf32>
    %4 = vector.broadcast %2 : vector<1x16xf32> to vector<16x16xf32>
    %5 = arith.mulf %0, %4 : vector<16x16xf32>
    %6 = vector.broadcast %3 : vector<1x16xf32> to vector<16x16xf32>
    %7 = arith.addf %5, %6 : vector<16x16xf32>
    %cst = arith.constant -5.000000e+00 : f32
    %cst_3 = arith.constant 5.000000e+00 : f32
    %8 = vector.broadcast %cst : f32 to vector<16x16xf32>
    %9 = arith.maximumf %8, %7 : vector<16x16xf32>
    %10 = vector.broadcast %cst_3 : f32 to vector<16x16xf32>
    %11 = arith.minimumf %10, %9 : vector<16x16xf32>
    %c0_4 = arith.constant 0 : index
    %c0_5 = arith.constant 0 : index
    %12 = vector.load %arg6[%c0_4, %c0_5] : memref<3x128xf32, #tpu.memory_space<vmem>>, vector<3x128xf32>
    %13 = arith.truncf %11 : vector<16x16xf32> to vector<16x16xbf16>
    %c0_6 = arith.constant 0 : index
    %c0_7 = arith.constant 0 : index
    %14 = vector.load %arg3[%c0_6, %c0_7] : memref<16x128xbf16, #tpu.memory_space<vmem>>, vector<16x128xbf16>
    %cst_8 = arith.constant dense<0.000000e+00> : vector<16x128xf32>
    %15 = tpu.matmul %13, %14, %cst_8 {dimension_numbers = #tpu.dot_dimension_numbers<[1], [0], [0], [1], [0, 0, 1, 1], [], []>} : vector<16x16xbf16>, vector<16x128xbf16>, vector<16x128xf32> -> vector<16x128xf32>
    %16 = vector.extract_strided_slice %12 {offsets = [0, 0], sizes = [1, 128], strides = [1, 1]} : vector<3x128xf32> to vector<1x128xf32>
    %17 = vector.broadcast %16 : vector<1x128xf32> to vector<16x128xf32>
    %18 = arith.addf %15, %17 : vector<16x128xf32>
    %19 = math.tanh %18 : vector<16x128xf32>
    %20 = arith.truncf %19 : vector<16x128xf32> to vector<16x128xbf16>
    %c0_9 = arith.constant 0 : index
    %c0_10 = arith.constant 0 : index
    %21 = vector.load %arg4[%c0_9, %c0_10] : memref<128x128xbf16, #tpu.memory_space<vmem>>, vector<128x128xbf16>
    %cst_11 = arith.constant dense<0.000000e+00> : vector<16x128xf32>
    %22 = tpu.matmul %20, %21, %cst_11 {dimension_numbers = #tpu.dot_dimension_numbers<[1], [0], [0], [1], [0, 0, 1, 1], [], []>} : vector<16x128xbf16>, vector<128x128xbf16>, vector<16x128xf32> -> vector<16x128xf32>
    %23 = vector.extract_strided_slice %12 {offsets = [1, 0], sizes = [1, 128], strides = [1, 1]} : vector<3x128xf32> to vector<1x128xf32>
    %24 = vector.broadcast %23 : vector<1x128xf32> to vector<16x128xf32>
    %25 = arith.addf %22, %24 : vector<16x128xf32>
    %26 = math.tanh %25 : vector<16x128xf32>
    %27 = arith.truncf %26 : vector<16x128xf32> to vector<16x128xbf16>
    %c0_12 = arith.constant 0 : index
    %c0_13 = arith.constant 0 : index
    %28 = vector.load %arg5[%c0_12, %c0_13] : memref<128x128xbf16, #tpu.memory_space<vmem>>, vector<128x128xbf16>
    %cst_14 = arith.constant dense<0.000000e+00> : vector<16x128xf32>
    %29 = tpu.matmul %27, %28, %cst_14 {dimension_numbers = #tpu.dot_dimension_numbers<[1], [0], [0], [1], [0, 0, 1, 1], [], []>} : vector<16x128xbf16>, vector<128x128xbf16>, vector<16x128xf32> -> vector<16x128xf32>
    %30 = vector.extract_strided_slice %12 {offsets = [2, 0], sizes = [1, 128], strides = [1, 1]} : vector<3x128xf32> to vector<1x128xf32>
    %31 = vector.broadcast %30 : vector<1x128xf32> to vector<16x128xf32>
    %32 = arith.addf %29, %31 : vector<16x128xf32>
    %33 = arith.truncf %32 : vector<16x128xf32> to vector<16x128xbf16>
    %c0_15 = arith.constant 0 : index
    %c0_16 = arith.constant 0 : index
    %34 = vector.load %arg7[%c0_15, %c0_16] : memref<16x128xbf16, #tpu.memory_space<vmem>>, vector<16x128xbf16>
    tpu.vector_store %arg7[%c0_15, %c0_16], %33 {strides = array<i32>} : memref<16x128xbf16, #tpu.memory_space<vmem>>, vector<16x128xbf16>,
    return
  }
  func.func @transform_0(%arg0: i32) -> (i32, i32) {
    %c0_i32 = arith.constant 0 : i32
    %c0_i32_0 = arith.constant 0 : i32
    return %arg0, %c0_i32 : i32, i32
  }
  func.func @transform_1(%arg0: i32) -> (i32, i32) {
    %c0_i32 = arith.constant 0 : i32
    %c0_i32_0 = arith.constant 0 : i32
    %c0_i32_1 = arith.constant 0 : i32
    return %c0_i32, %c0_i32_0 : i32, i32
  }
  func.func @transform_2(%arg0: i32) -> (i32, i32) {
    %c0_i32 = arith.constant 0 : i32
    %c0_i32_0 = arith.constant 0 : i32
    %c0_i32_1 = arith.constant 0 : i32
    return %c0_i32, %c0_i32_0 : i32, i32
  }
  func.func @transform_3(%arg0: i32) -> (i32, i32) {
    %c0_i32 = arith.constant 0 : i32
    %c0_i32_0 = arith.constant 0 : i32
    %c0_i32_1 = arith.constant 0 : i32
    return %c0_i32, %c0_i32_0 : i32, i32
  }
  func.func @transform_4(%arg0: i32) -> (i32, i32) {
    %c0_i32 = arith.constant 0 : i32
    %c0_i32_0 = arith.constant 0 : i32
    %c0_i32_1 = arith.constant 0 : i32
    return %c0_i32, %c0_i32_0 : i32, i32
  }
  func.func @transform_5(%arg0: i32) -> (i32, i32) {
    %c0_i32 = arith.constant 0 : i32
    %c0_i32_0 = arith.constant 0 : i32
    %c0_i32_1 = arith.constant 0 : i32
    return %c0_i32, %c0_i32_0 : i32, i32
  }
  func.func @transform_6(%arg0: i32) -> (i32, i32) {
    %c0_i32 = arith.constant 0 : i32
    %c0_i32_0 = arith.constant 0 : i32
    return %arg0, %c0_i32 : i32, i32
  }
}

</mosaic_0001>

<llo_original>
// kernel: actor_critic_forward.1
$region0: #{actor_critic_forward.1}
  #allocation0 [shape = 'u32[]', space=smem, size = 0x4, offset = 0x4, fixed_abs, tag = 'smem constant byte address 0x4 - core index']
  #allocation1 [shape = 'u32[144,128]{1,0:T(1,128)}', space=vmem, size = 0x12000, scoped, tag = 'internal scratch']
  %s0 = inlined_call_operand.vmem [shape: f32[16,16], index: 0, kind: input, shape index: {}]
  %s1 = inlined_call_operand.vmem [shape: f32[2,16], index: 1, kind: input, shape index: {}]
  %s2 = inlined_call_operand.vmem [shape: bf16[16,128], index: 2, kind: input, shape index: {}]
  %s3 = inlined_call_operand.hbm [shape: bf16[128,128], index: 3, kind: input, shape index: {}]
  %s4 = inlined_call_operand.hbm [shape: bf16[128,128], index: 4, kind: input, shape index: {}]
  %s5 = inlined_call_operand.vmem [shape: f32[3,128], index: 5, kind: input, shape index: {}]
  %s6 = inlined_call_operand.vmem [shape: bf16[16,128], index: 6, kind: output, shape index: {}]
  %s7 = sld [smem:[#allocation0]]
  $region42: #{actor_critic_forward.1} parent=0
    _
  %s9 = ssub.s32 1, %s7
  %s10 = scalar_select 0, %s9, %s7
  $region1: #{actor_critic_forward.1} parent=0
    #allocation2 [shape = 'u8[32768]{0}', space=vmem, size = 0x8000, scoped, tag = 'input window, operand 3, single buffered']
    #allocation3 [shape = 's32[1]{0}', space=sflag, size = 0x4, scoped, tag = 'scoped memory for actor_critic_forward.1']
    #allocation4 [shape = 'u8[32768]{0}', space=vmem, size = 0x8000, scoped, tag = 'input window, operand 4, single buffered']
    #allocation5 [shape = 's32[1]{0}', space=sflag, size = 0x4, scoped, tag = 'scoped memory for actor_critic_forward.1']
    %11 = vsyncpa [#allocation3], 0
    %12 = vsyncpa [#allocation5], 0
    // Predicated region
    $region2: #{actor_critic_forward.1} parent=1 // pred_check
      _
    $region3: #{actor_critic_forward.1} parent=1 // pred_check_branch
      %14 = sbr.rel (0) target = $region5
    $region4: #{actor_critic_forward.1} parent=1 // pred_region
      _
    $region5: #{actor_critic_forward.1} parent=1 // pred_fallthru
      _
    // Predicated region
    $region6: #{actor_critic_forward.1} parent=1 // pred_check
      _
    $region7: #{actor_critic_forward.1} parent=1 // pred_check_branch
      %16 = sbr.rel (0) target = $region9
    $region8: #{actor_critic_forward.1} parent=1 // pred_region
      _
    $region9: #{actor_critic_forward.1} parent=1 // pred_fallthru
      _
    // Predicated region
    $region10: #{actor_critic_forward.1} parent=1 // pred_check
      _
    $region11: #{actor_critic_forward.1} parent=1 // pred_check_branch
      %18 = sbr.rel (0) target = $region13
    $region12: #{actor_critic_forward.1} parent=1 // pred_region
      _
    $region13: #{actor_critic_forward.1} parent=1 // pred_fallthru
      _
    // Predicated region
    $region14: #{actor_critic_forward.1} parent=1 // pred_check
      _
    $region15: #{actor_critic_forward.1} parent=1 // pred_check_branch
      %20 = sbr.rel (0) target = $region17
    $region16: #{actor_critic_forward.1} parent=1 // pred_region
      %s22 = ssub.s32 1024, 1024
      %23 = vsyncadd [#allocation3], %s22
      %s24 = sshll.u32 [#allocation2], 4
      %s25 = int_to_ptr.vmem [resolvable:$true] %s24
      %30 = dma.hbm_to_vmem [thread:$0]  %s3, 1024, %s25, [#allocation3], 64, 64, 4
    $region17: #{actor_critic_forward.1} parent=1 // pred_fallthru
      _
    // Predicated region
    $region18: #{actor_critic_forward.1} parent=1 // pred_check
      _
    $region19: #{actor_critic_forward.1} parent=1 // pred_check_branch
      %32 = sbr.rel (0) target = $region21
    $region20: #{actor_critic_forward.1} parent=1 // pred_region
      %s34 = ssub.s32 1024, 1024
      %35 = vsyncadd [#allocation5], %s34
      %s36 = sshll.u32 [#allocation4], 4
      %s37 = int_to_ptr.vmem [resolvable:$true] %s36
      %42 = dma.hbm_to_vmem [thread:$0]  %s4, 1024, %s37, [#allocation5], 64, 64, 4
    $region21: #{actor_critic_forward.1} parent=1 // pred_fallthru
      _
    // Predicated region
    $region22: #{actor_critic_forward.1} parent=1 // pred_check
      _
    $region23: #{actor_critic_forward.1} parent=1 // pred_check_branch
      %44 = sbr.rel (0) target = $region25
    $region24: #{actor_critic_forward.1} parent=1 // pred_region
      _
    $region25: #{actor_critic_forward.1} parent=1 // pred_fallthru
      _
    // Predicated region
    $region26: #{actor_critic_forward.1} parent=1 // pred_check
      _
    $region27: #{actor_critic_forward.1} parent=1 // pred_check_branch
      %46 = sbr.rel (0) target = $region29
    $region28: #{actor_critic_forward.1} parent=1 // pred_region
      %47 = dma.done [#allocation3], 1024
    $region29: #{actor_critic_forward.1} parent=1 // pred_fallthru
      _
    // Predicated region
    $region30: #{actor_critic_forward.1} parent=1 // pred_check
      _
    $region31: #{actor_critic_forward.1} parent=1 // pred_check_branch
      %49 = sbr.rel (0) target = $region33
    $region32: #{actor_critic_forward.1} parent=1 // pred_region
      %50 = dma.done [#allocation5], 1024
    $region33: #{actor_critic_forward.1} parent=1 // pred_fallthru
      _
    %v52 = vld [vmem:[%s0] sm:$0xff]
    %v53 = vld [vmem:[%s0 + $0x8] sm:$0xff]
    %v54 = vld [vmem:[%s1] sm:$0x3]
    %v55 = vlaneseq
    %v56 = vshrl.u32 %v55, 7
    %v57 = vsub.s32 0, %v56
    %v58 = vrot.slane %v54, %v57
    %v59 = vmul.f32 %v52, %v58
    %v60 = vmul.f32 %v53, %v58
    %v61 = vlaneseq
    %v62 = vshrl.u32 %v61, 7
    %v63 = vsub.s32 1, %v62
    %v64 = vrot.slane %v54, %v63
    %v65 = vadd.f32 %v59, %v64
    %v66 = vadd.f32 %v60, %v64
    %v67 = vmax.f32 %v65, -5.0
    %v68 = vmax.f32 %v66, -5.0
    %v69 = vmin.f32 %v67, 5.0
    %v70 = vmin.f32 %v68, 5.0
    %v71 = vld [vmem:[%s5] sm:$0x7]
    %v72 = vpack.c.bf16 %v70, %v69
    %v73 = vld [vmem:[%s2] sm:$0xf]
    %v74 = vld [vmem:[%s2 + $0x4] sm:$0xf]
    %v75 = vlaneseq
    %v76 = vshrl.u32 %v75, 7
    %v77 = vsub.s32 0, %v76
    %v78 = vrot.slane %v71, %v77
    %v81 = vunpack.c.l.b16 %v73
    %v82 = vunpack.c.l.b16 %v74
    %v83 = vpack.c.b16 %v82, %v81
    %vm85 = vcmask 130048
    %v87 = vsel %vm85, %v72, 0
    %89 = vmatprep.subr.bf16.mxu0 0
    %90 = vmatpush1.bf16.msra.mxu0 0
    %91 = vmatprep.subr.bf16.mxu0 0
    %92 = vmatpush1.bf16.msra.mxu0 0
    %93 = vmatprep.subr.bf16.mxu0 0
    %94 = vmatpush1.bf16.msra.mxu0 0
    %95 = vmatprep.subr.bf16.mxu0 0
    %96 = vmatpush1.bf16.msra.mxu0 0
    %97 = vmatprep.subr.bf16.mxu0 0
    %98 = vmatpush1.bf16.msra.mxu0 0
    %99 = vmatprep.subr.bf16.mxu0 0
    %100 = vmatpush1.bf16.msra.mxu0 0
    %101 = vmatprep.subr.bf16.mxu0 0
    %102 = vmatpush1.bf16.msra.mxu0 0
    %103 = vmatprep.subr.bf16.mxu0 0
    %104 = vmatpush1.bf16.msra.mxu0 %v83
    %105 = vmatprep.subr.bf16.mxu0 0
    %106 = vmatpush2.bf16.msra.mxu0 0
    %107 = vmatprep.subr.bf16.mxu0 0
    %108 = vmatpush2.bf16.msra.mxu0 0
    %109 = vmatprep.subr.bf16.mxu0 0
    %110 = vmatpush2.bf16.msra.mxu0 0
    %111 = vmatprep.subr.bf16.mxu0 0
    %112 = vmatpush2.bf16.msra.mxu0 0
    %113 = vmatprep.subr.bf16.mxu0 0
    %114 = vmatpush2.bf16.msra.mxu0 0
    %115 = vmatprep.subr.bf16.mxu0 0
    %116 = vmatpush2.bf16.msra.mxu0 0
    %117 = vmatprep.subr.bf16.mxu0 0
    %118 = vmatpush2.bf16.msra.mxu0 0
    %119 = vmatprep.subr.bf16.mxu0 0
    %120 = vmatpush2.bf16.msra.mxu0 0
    %121 = vmatprep.mubr.bf16.mxu0 0
    %122 = vmatmul.mubr.bf16.gmra.mxu0 %v87
    %v123 = vpop.f32.mrf.mxu0
    %v124 = vadd.f32 %v78, %v123
    %v125 = vpop.f32.mrf.mxu0
    %v126 = vpop.f32.mrf.mxu0
    %v127 = vadd.f32 %v78, %v126
    %v128 = vpop.f32.mrf.mxu0
    %129 = vdwg.mxu0
    %v130 = vtanh.pop %v124
    %v131 = vtanh.pop %v127
    %v132 = vpack.c.bf16 %v131, %v130
    %v133 = vld [vmem:[#allocation2] sm:$0xf]
    %v134 = vld [vmem:[#allocation2 + $0x4] sm:$0xf]
    %v135 = vld [vmem:[#allocation2 + $0x8] sm:$0xf]
    %v136 = vld [vmem:[#allocation2 + $0xc] sm:$0xf]
    %v137 = vld [vmem:[#allocation2 + $0x10] sm:$0xf]
    %v138 = vld [vmem:[#allocation2 + $0x14] sm:$0xf]
    %v139 = vld [vmem:[#allocation2 + $0x18] sm:$0xf]
    %v140 = vld [vmem:[#allocation2 + $0x1c] sm:$0xf]
    %v141 = vld [vmem:[#allocation2 + $0x20] sm:$0xf]
    %v142 = vld [vmem:[#allocation2 + $0x24] sm:$0xf]
    %v143 = vld [vmem:[#allocation2 + $0x28] sm:$0xf]
    %v144 = vld [vmem:[#allocation2 + $0x2c] sm:$0xf]
    %v145 = vld [vmem:[#allocation2 + $0x30] sm:$0xf]
    %v146 = vld [vmem:[#allocation2 + $0x34] sm:$0xf]
    %v147 = vld [vmem:[#allocation2 + $0x38] sm:$0xf]
    %v148 = vld [vmem:[#allocation2 + $0x3c] sm:$0xf]
    %v149 = vlaneseq
    %v150 = vshrl.u32 %v149, 7
    %v151 = vsub.s32 1, %v150
    %v152 = vrot.slane %v71, %v151
    %v169 = vunpack.c.l.b16 %v133
    %v170 = vunpack.c.l.b16 %v134
    %v171 = vunpack.c.l.b16 %v135
    %v172 = vunpack.c.l.b16 %v136
    %v173 = vunpack.c.l.b16 %v137
    %v174 = vunpack.c.l.b16 %v138
    %v175 = vunpack.c.l.b16 %v139
    %v176 = vunpack.c.l.b16 %v140
    %v177 = vunpack.c.l.b16 %v141
    %v178 = vunpack.c.l.b16 %v142
    %v179 = vunpack.c.l.b16 %v143
    %v180 = vunpack.c.l.b16 %v144
    %v181 = vunpack.c.l.b16 %v145
    %v182 = vunpack.c.l.b16 %v146
    %v183 = vunpack.c.l.b16 %v147
    %v184 = vunpack.c.l.b16 %v148
    %v185 = vpack.c.b16 %v170, %v169
    %v186 = vpack.c.b16 %v172, %v171
    %v187 = vpack.c.b16 %v174, %v173
    %v188 = vpack.c.b16 %v176, %v175
    %v189 = vpack.c.b16 %v178, %v177
    %v190 = vpack.c.b16 %v180, %v179
    %v191 = vpack.c.b16 %v182, %v181
    %v192 = vpack.c.b16 %v184, %v183
    %201 = vmatprep.subr.bf16.mxu0 0
    %202 = vmatpush1.bf16.msra.mxu0 %v192
    %203 = vmatprep.subr.bf16.mxu0 0
    %204 = vmatpush1.bf16.msra.mxu0 %v191
    %205 = vmatprep.subr.bf16.mxu0 0
    %206 = vmatpush1.bf16.msra.mxu0 %v190
    %207 = vmatprep.subr.bf16.mxu0 0
    %208 = vmatpush1.bf16.msra.mxu0 %v189
    %209 = vmatprep.subr.bf16.mxu0 0
    %210 = vmatpush1.bf16.msra.mxu0 %v188
    %211 = vmatprep.subr.bf16.mxu0 0
    %212 = vmatpush1.bf16.msra.mxu0 %v187
    %213 = vmatprep.subr.bf16.mxu0 0
    %214 = vmatpush1.bf16.msra.mxu0 %v186
    %215 = vmatprep.subr.bf16.mxu0 0
    %216 = vmatpush1.bf16.msra.mxu0 %v185
    %217 = vmatprep.subr.bf16.mxu0 0
    %218 = vmatpush2.bf16.msra.mxu0 0
    %219 = vmatprep.subr.bf16.mxu0 0
    %220 = vmatpush2.bf16.msra.mxu0 0
    %221 = vmatprep.subr.bf16.mxu0 0
    %222 = vmatpush2.bf16.msra.mxu0 0
    %223 = vmatprep.subr.bf16.mxu0 0
    %224 = vmatpush2.bf16.msra.mxu0 0
    %225 = vmatprep.subr.bf16.mxu0 0
    %226 = vmatpush2.bf16.msra.mxu0 0
    %227 = vmatprep.subr.bf16.mxu0 0
    %228 = vmatpush2.bf16.msra.mxu0 0
    %229 = vmatprep.subr.bf16.mxu0 0
    %230 = vmatpush2.bf16.msra.mxu0 0
    %231 = vmatprep.subr.bf16.mxu0 0
    %232 = vmatpush2.bf16.msra.mxu0 0
    %233 = vmatprep.mubr.bf16.mxu0 0
    %234 = vmatmul.mubr.bf16.gmra.mxu0 %v132
    %v235 = vpop.f32.mrf.mxu0
    %v236 = vadd.f32 %v152, %v235
    %v237 = vpop.f32.mrf.mxu0
    %v238 = vpop.f32.mrf.mxu0
    %v239 = vadd.f32 %v152, %v238
    %v240 = vpop.f32.mrf.mxu0
    %241 = vdwg.mxu0
    %v242 = vtanh.pop %v236
    %v243 = vtanh.pop %v239
    %v244 = vpack.c.bf16 %v243, %v242
    %v245 = vld [vmem:[#allocation4] sm:$0xf]
    %v246 = vld [vmem:[#allocation4 + $0x4] sm:$0xf]
    %v247 = vld [vmem:[#allocation4 + $0x8] sm:$0xf]
    %v248 = vld [vmem:[#allocation4 + $0xc] sm:$0xf]
    %v249 = vld [vmem:[#allocation4 + $0x10] sm:$0xf]
    %v250 = vld [vmem:[#allocation4 + $0x14] sm:$0xf]
    %v251 = vld [vmem:[#allocation4 + $0x18] sm:$0xf]
    %v252 = vld [vmem:[#allocation4 + $0x1c] sm:$0xf]
    %v253 = vld [vmem:[#allocation4 + $0x20] sm:$0xf]
    %v254 = vld [vmem:[#allocation4 + $0x24] sm:$0xf]
    %v255 = vld [vmem:[#allocation4 + $0x28] sm:$0xf]
    %v256 = vld [vmem:[#allocation4 + $0x2c] sm:$0xf]
    %v257 = vld [vmem:[#allocation4 + $0x30] sm:$0xf]
    %v258 = vld [vmem:[#allocation4 + $0x34] sm:$0xf]
    %v259 = vld [vmem:[#allocation4 + $0x38] sm:$0xf]
    %v260 = vld [vmem:[#allocation4 + $0x3c] sm:$0xf]
    %v261 = vlaneseq
    %v262 = vshrl.u32 %v261, 7
    %v263 = vsub.s32 2, %v262
    %v264 = vrot.slane %v71, %v263
    %v281 = vunpack.c.l.b16 %v245
    %v282 = vunpack.c.l.b16 %v246
    %v283 = vunpack.c.l.b16 %v247
    %v284 = vunpack.c.l.b16 %v248
    %v285 = vunpack.c.l.b16 %v249
    %v286 = vunpack.c.l.b16 %v250
    %v287 = vunpack.c.l.b16 %v251
    %v288 = vunpack.c.l.b16 %v252
    %v289 = vunpack.c.l.b16 %v253
    %v290 = vunpack.c.l.b16 %v254
    %v291 = vunpack.c.l.b16 %v255
    %v292 = vunpack.c.l.b16 %v256
    %v293 = vunpack.c.l.b16 %v257
    %v294 = vunpack.c.l.b16 %v258
    %v295 = vunpack.c.l.b16 %v259
    %v296 = vunpack.c.l.b16 %v260
    %v297 = vpack.c.b16 %v282, %v281
    %v298 = vpack.c.b16 %v284, %v283
    %v299 = vpack.c.b16 %v286, %v285
    %v300 = vpack.c.b16 %v288, %v287
    %v301 = vpack.c.b16 %v290, %v289
    %v302 = vpack.c.b16 %v292, %v291
    %v303 = vpack.c.b16 %v294, %v293
    %v304 = vpack.c.b16 %v296, %v295
    %313 = vmatprep.subr.bf16.mxu0 0
    %314 = vmatpush1.bf16.msra.mxu0 %v304
    %315 = vmatprep.subr.bf16.mxu0 0
    %316 = vmatpush1.bf16.msra.mxu0 %v303
    %317 = vmatprep.subr.bf16.mxu0 0
    %318 = vmatpush1.bf16.msra.mxu0 %v302
    %319 = vmatprep.subr.bf16.mxu0 0
    %320 = vmatpush1.bf16.msra.mxu0 %v301
    %321 = vmatprep.subr.bf16.mxu0 0
    %322 = vmatpush1.bf16.msra.mxu0 %v300
    %323 = vmatprep.subr.bf16.mxu0 0
    %324 = vmatpush1.bf16.msra.mxu0 %v299
    %325 = vmatprep.subr.bf16.mxu0 0
    %326 = vmatpush1.bf16.msra.mxu0 %v298
    %327 = vmatprep.subr.bf16.mxu0 0
    %328 = vmatpush1.bf16.msra.mxu0 %v297
    %329 = vmatprep.subr.bf16.mxu0 0
    %330 = vmatpush2.bf16.msra.mxu0 0
    %331 = vmatprep.subr.bf16.mxu0 0
    %332 = vmatpush2.bf16.msra.mxu0 0
    %333 = vmatprep.subr.bf16.mxu0 0
    %334 = vmatpush2.bf16.msra.mxu0 0
    %335 = vmatprep.subr.bf16.mxu0 0
    %336 = vmatpush2.bf16.msra.mxu0 0
    %337 = vmatprep.subr.bf16.mxu0 0
    %338 = vmatpush2.bf16.msra.mxu0 0
    %339 = vmatprep.subr.bf16.mxu0 0
    %340 = vmatpush2.bf16.msra.mxu0 0
    %341 = vmatprep.subr.bf16.mxu0 0
    %342 = vmatpush2.bf16.msra.mxu0 0
    %343 = vmatprep.subr.bf16.mxu0 0
    %344 = vmatpush2.bf16.msra.mxu0 0
    %345 = vmatprep.mubr.bf16.mxu0 0
    %346 = vmatmul.mubr.bf16.gmra.mxu0 %v244
    %v347 = vpop.f32.mrf.mxu0
    %v348 = vadd.f32 %v264, %v347
    %v349 = vpop.f32.mrf.mxu0
    %v350 = vpop.f32.mrf.mxu0
    %v351 = vadd.f32 %v264, %v350
    %v352 = vpop.f32.mrf.mxu0
    %353 = vdwg.mxu0
    %v354 = vpack.c.bf16 %v351, %v348
    %v356 = vunpack.c.l.b16 %v354
    %v357 = vunpack.c.h.b16 %v354
    %v358 = vpack.c.b16 %v356, %v356
    %v359 = vpack.c.b16 %v357, %v357
    %362 = vst [vmem:[%s6] sm:$0xf] %v358
    %363 = vst [vmem:[%s6 + $0x4] sm:$0xf] %v359
    // Predicated region
    $region34: #{actor_critic_forward.1} parent=1 // pred_check
      _
    $region35: #{actor_critic_forward.1} parent=1 // pred_check_branch
      %365 = sbr.rel (0) target = $region37
    $region36: #{actor_critic_forward.1} parent=1 // pred_region
      _
    $region37: #{actor_critic_forward.1} parent=1 // pred_fallthru
      _
    // Predicated region
    $region38: #{actor_critic_forward.1} parent=1 // pred_check
      _
    $region39: #{actor_critic_forward.1} parent=1 // pred_check_branch
      %367 = sbr.rel (0) target = $region41
    $region40: #{actor_critic_forward.1} parent=1 // pred_region
      _
    $region41: #{actor_critic_forward.1} parent=1 // pred_fallthru
      _
    %368 = vsyncpa [#allocation3], 1
    %369 = vsyncpa [#allocation5], 1

</llo_original>
